<compile_context>
chip_gen: v5e
topology: v5e:2x2
jax: 0.10.0
libtpu: 0.0.40
codegen_flags: <defaults>
</compile_context>

<pallas_src>
import jax
import jax.numpy as jnp
import numpy as np
from jax.experimental import pallas as pl
from jax.experimental.pallas import tpu as pltpu

BN_EPS = 1e-5
_HAS_BUFFERED = hasattr(pl, "Buffered")


def _round_up(x, m):
    return (x + m - 1) // m * m


def _vmem_budget_bytes():
    """~75% of this chip's physical VMEM (64 MiB on v7x, 128 MiB on v5e/v6e)."""
    cap = 64 * 1024 * 1024                       # conservative fallback (v7x)
    try:
        cap = int(getattr(pltpu.get_tpu_info(), "vmem_capacity_bytes", cap))
    except Exception:
        pass
    return int(0.75 * cap)


def _resident_spec(block_shape):
    """BlockSpec for an operand that never changes across the grid.

    Single-buffered (pl.Buffered(1)) when the installed JAX supports
    pipeline_mode -- halves the largest VMEM consumer (the weights)."""
    nd = len(block_shape)
    index_map = lambda i: (0,) * nd
    if _HAS_BUFFERED:
        try:
            return pl.BlockSpec(block_shape, index_map,
                                pipeline_mode=pl.Buffered(1))
        except TypeError:
            pass
    return pl.BlockSpec(block_shape, index_map)


def _pick_batch_tile(batch, in_p, hid_p, out_p, budget, materialize_h,
                     requested):
    """Largest batch tile whose streamed (double-buffered) refs plus resident
    (single-buffered) weights fit within the VMEM budget."""
    b_cap = _round_up(batch, 8)
    if requested is not None:
        return max(8, min(_round_up(requested, 8), b_cap))
    resident = 4 * (in_p * hid_p + hid_p * out_p + 4 * hid_p + 2 * out_p)
    avail = budget - resident
    s1_row = in_p + (hid_p if materialize_h else 0)          # x in (+ h out)
    s2_row = (hid_p if materialize_h else in_p) + out_p      # h|x in + out
    per_row = 2 * 4 * max(s1_row, s2_row)                    # 2x double buffer
    for tb in (1024, 512, 256, 128, 64, 32, 16, 8):
        if tb <= b_cap and tb * per_row <= avail:
            return tb
    # TODO(synk): if W1/W2 alone exceed the VMEM budget (very large hidden
    # dims), add a hidden-dim grid axis that tiles the weights instead of
    # keeping them fully resident.
    return min(8, b_cap)


# ----------------------------------------------------------------- kernels --
def _make_stage1_kernel(*, store_h, batch, tb, mask_rows):
    """h = x @ W1; per-tile centered sum-of-squares (and optionally h)."""

    def kernel(x_ref, w1_ref, mean_ref, *out_refs):
        if store_h:
            h_ref, ssq_ref = out_refs
        else:
            (ssq_ref,) = out_refs
        h = jnp.dot(x_ref[...], w1_ref[...],
                    preferred_element_type=jnp.float32)
        if store_h:
            h_ref[...] = h
        d = h - mean_ref[...]                 # centered -> stable variance
        if mask_rows:
            # Zero-padded batch rows would otherwise each contribute mean^2.
            rows = (jax.lax.broadcasted_iota(jnp.int32, d.shape, 0)
                    + pl.program_id(0) * tb)
            d = jnp.where(rows < batch, d, 0.0)
        # VPU sublane reduction: keeps the stats work off the MXU.
        ssq_ref[...] = jnp.sum(d * d, axis=0, keepdims=True)[None]

    return kernel


def _stage2_from_h_kernel(scale_ref, shift_ref, w2_ref, b2_ref, h_ref,
                          out_ref):
    y = jnp.maximum(h_ref[...] * scale_ref[...] + shift_ref[...], 0.0)
    out = jnp.dot(y, w2_ref[...], preferred_element_type=jnp.float32)
    out_ref[...] = (out + b2_ref[...]).astype(out_ref.dtype)


def _stage2_from_x_kernel(x_ref, w1_ref, scale_ref, shift_ref, w2_ref, b2_ref,
                          out_ref):
    h = jnp.dot(x_ref[...], w1_ref[...], preferred_element_type=jnp.float32)
    y = jnp.maximum(h * scale_ref[...] + shift_ref[...], 0.0)
    out = jnp.dot(y, w2_ref[...], preferred_element_type=jnp.float32)
    out_ref[...] = (out + b2_ref[...]).astype(out_ref.dtype)


# ----------------------------------------------------------------- wrapper --
def prepare_params(params):
    """Pad weights to lane-dense (multiple-of-128) shapes ONCE at init.

    (Per review: the per-call wrapper should not re-materialize padded W1/W2.)
    l1's bias is dropped: it cancels exactly inside training-mode BatchNorm."""
    w1, w2 = params["w1"], params["w2"]
    input_dim, hidden_dim = w1.shape
    output_dim = w2.shape[1]
    in_p = _round_up(input_dim, 128)
    hid_p = _round_up(hidden_dim, 128)
    out_p = _round_up(output_dim, 128)
    f32 = jnp.float32

    def pad2(a, rows, cols):
        a = jnp.asarray(a, f32)
        if a.ndim == 1:
            a = a.reshape(1, -1)
        return jnp.zeros((rows, cols), f32).at[:a.shape[0], :a.shape[1]].set(a)

    return {
        "input_dim": input_dim, "hidden_dim": hidden_dim,
        "output_dim": output_dim,
        "in_p": in_p, "hid_p": hid_p, "out_p": out_p,
        "w1": pad2(w1, in_p, hid_p),
        "w2": pad2(w2, hid_p, out_p),
        "gamma": pad2(params["gamma"], 1, hid_p),
        "beta": pad2(params["beta"], 1, hid_p),
        "b2": pad2(params["b2"], 1, out_p),
    }


def mlp_forward(x, prep, *, batch_tile=None, materialize_h=None):
    """x: (B, input_dim) float32.  prep: output of prepare_params()."""
    if "in_p" not in prep:                    # accept raw params too
        prep = prepare_params(prep)
    B, input_dim = x.shape
    assert input_dim == prep["input_dim"]
    in_p, hid_p, out_p = prep["in_p"], prep["hid_p"], prep["out_p"]
    w1p, w2p = prep["w1"], prep["w2"]
    gamma, beta, b2 = prep["gamma"], prep["beta"], prep["b2"]
    f32 = jnp.float32

    budget = _vmem_budget_bytes()
    if materialize_h is None:
        # Small contraction dim -> both stages are HBM-bound; recomputing
        # h = x @ W1 in stage 2 is cheaper than round-tripping h through HBM.
        materialize_h = in_p > 512

    tb = _pick_batch_tile(B, in_p, hid_p, out_p, budget, materialize_h,
                          batch_tile)
    b_p = _round_up(B, tb)
    n_bt = b_p // tb
    mask_rows = b_p != B      # zero-pad rows must not pollute the variance

    # Only x is padded per call; weights were padded once in prepare_params().
    xp = jnp.zeros((b_p, in_p), f32).at[:B, :input_dim].set(x.astype(f32))

    # Per-feature mean of h = x @ W1, computed once and exactly off-kernel
    # (review: drop the ones-row matmul; b1 omitted -- it cancels in BN).
    colsum_x = jnp.sum(xp, axis=0, keepdims=True)
    mean = jnp.dot(colsum_x, w1p,
                   precision=jax.lax.Precision.HIGHEST) * (1.0 / B)

    cparams = pltpu.CompilerParams(dimension_semantics=("parallel",),
                                   vmem_limit_bytes=budget)

    # ------------------------------------------------------------ stage 1 ---
    kernel1 = _make_stage1_kernel(store_h=materialize_h, batch=B, tb=tb,
                                  mask_rows=mask_rows)
    ssq_spec = pl.BlockSpec((1, 1, hid_p), lambda i: (i, 0, 0))
    ssq_shape = jax.ShapeDtypeStruct((n_bt, 1, hid_p), f32)
    if materialize_h:
        out_shape1 = (jax.ShapeDtypeStruct((b_p, hid_p), f32), ssq_shape)
        out_specs1 = [pl.BlockSpec((tb, hid_p), lambda i: (i, 0)), ssq_spec]
    else:
        out_shape1, out_specs1 = ssq_shape, ssq_spec

    res1 = pl.pallas_call(
        kernel1,
        out_shape=out_shape1,
        grid_spec=pltpu.PrefetchScalarGridSpec(
            num_scalar_prefetch=0,
            grid=(n_bt,),
            in_specs=[
                pl.BlockSpec((tb, in_p), lambda i: (i, 0)),   # x (streamed)
                _resident_spec((in_p, hid_p)),                # W1
                _resident_spec((1, hid_p)),                   # mean
            ],
            out_specs=out_specs1,
        ),
        compiler_params=cparams,
    )(xp, w1p, mean)
    if materialize_h:
        h_arr, ssq_partial = res1
    else:
        h_arr, ssq_partial = None, res1

    # ------------- fold BatchNorm into per-feature scale/shift (once, XLA) ---
    ssq = jnp.sum(ssq_partial[:, 0, :], axis=0, keepdims=True)   # (1, H)
    var = ssq * (1.0 / B)                    # biased variance (training BN)
    inv_std = jax.lax.rsqrt(var + BN_EPS)
    scale = gamma * inv_std
    shift = beta - mean * scale

    # ------------------------------------------------------------ stage 2 ---
    if materialize_h:
        kernel2 = _stage2_from_h_kernel
        in_specs2 = [
            _resident_spec((1, hid_p)),                       # scale
            _resident_spec((1, hid_p)),                       # shift
            _resident_spec((hid_p, out_p)),                   # W2
            _resident_spec((1, out_p)),                       # b2
            pl.BlockSpec((tb, hid_p), lambda i: (i, 0)),      # h (streamed)
        ]
        args2 = (scale, shift, w2p, b2, h_arr)
    else:
        kernel2 = _stage2_from_x_kernel
        in_specs2 = [
            pl.BlockSpec((tb, in_p), lambda i: (i, 0)),       # x (streamed)
            _resident_spec((in_p, hid_p)),                    # W1
            _resident_spec((1, hid_p)),                       # scale
            _resident_spec((1, hid_p)),                       # shift
            _resident_spec((hid_p, out_p)),                   # W2
            _resident_spec((1, out_p)),                       # b2
        ]
        args2 = (xp, w1p, scale, shift, w2p, b2)

    out_padded = pl.pallas_call(
        kernel2,
        out_shape=jax.ShapeDtypeStruct((b_p, out_p), x.dtype),
        grid_spec=pltpu.PrefetchScalarGridSpec(
            num_scalar_prefetch=0,
            grid=(n_bt,),
            in_specs=in_specs2,
            out_specs=pl.BlockSpec((tb, out_p), lambda i: (i, 0)),
        ),
        compiler_params=cparams,
    )(*args2)

    return out_padded[:B, :prep["output_dim"]]


# ----------------------------------------------------------------- helpers --
def init_params(key, input_dim, hidden_dim, output_dim):
    """PyTorch-style init (uniform +-1/sqrt(fan_in)); weights stored (in, out)."""
    k1, k2, k3, k4 = jax.random.split(key, 4)
    lim1 = 1.0 / jnp.sqrt(input_dim)
    lim2 = 1.0 / jnp.sqrt(hidden_dim)
    return {
        "w1": jax.random.uniform(k1, (input_dim, hidden_dim), jnp.float32,
                                 -lim1, lim1),
        "b1": jax.random.uniform(k2, (1, hidden_dim), jnp.float32, -lim1, lim1),
        "gamma": jnp.ones((1, hidden_dim), jnp.float32),
        "beta": jnp.zeros((1, hidden_dim), jnp.float32),
        "w2": jax.random.uniform(k3, (hidden_dim, output_dim), jnp.float32,
                                 -lim2, lim2),
        "b2": jax.random.uniform(k4, (1, output_dim), jnp.float32, -lim2, lim2),
    }


def mlp_reference(x, params):
    """float64 reference with full PyTorch training-mode semantics (incl. b1)."""
    x64 = np.asarray(x, np.float64)
    w1 = np.asarray(params["w1"], np.float64)
    b1 = np.asarray(params["b1"], np.float64)
    gamma = np.asarray(params["gamma"], np.float64)
    beta = np.asarray(params["beta"], np.float64)
    w2 = np.asarray(params["w2"], np.float64)
    b2 = np.asarray(params["b2"], np.float64)
    h = x64 @ w1 + b1
    mean = h.mean(axis=0, keepdims=True)
    var = ((h - mean) ** 2).mean(axis=0, keepdims=True)   # biased (training BN)
    h = gamma * (h - mean) / np.sqrt(var + BN_EPS) + beta
    h = np.maximum(h, 0.0)
    return h @ w2 + b2


if __name__ == "__main__":
    key = jax.random.PRNGKey(0)
    kx, kp = jax.random.split(key)

    batch, input_dim, hidden_dim, output_dim = 12, 16, 32, 8
    x = jax.random.normal(kx, (batch, input_dim), jnp.float32)
    params = init_params(kp, input_dim, hidden_dim, output_dim)
    prep = prepare_params(params)

    ref = mlp_reference(x, params)

    # Fused path (auto-selected for small input_dim): h recomputed in stage 2.
    # batch_tile=8 with batch=12 exercises multi-tile stats + row-pad masking.
    out_fused = mlp_forward(x, prep, batch_tile=8, materialize_h=False)
    jax.block_until_ready(out_fused)
    # Materialized-h path (the large-input_dim configuration).
    out_mat = mlp_forward(x, prep, batch_tile=8, materialize_h=True)
    jax.block_until_ready(out_mat)

    assert out_fused.shape == (batch, output_dim)
    assert out_mat.shape == (batch, output_dim)
    assert np.allclose(np.asarray(out_fused), ref, atol=2e-5, rtol=2e-5), (
        "fused-path output mismatch vs float64 reference")
    assert np.allclose(np.asarray(out_mat), ref, atol=2e-5, rtol=2e-5), (
        "materialized-h output mismatch vs float64 reference")

    print("KERNEL_OK")
</pallas_src>

<mosaic_0001>
module attributes {stable_mosaic.version = 11 : i64} {
  func.func @kernel(%arg0: i32, %arg1: memref<8x128xf32, #tpu.memory_space<vmem>>, %arg2: memref<128x128xf32, #tpu.memory_space<vmem>>, %arg3: memref<1x128xf32, #tpu.memory_space<vmem>>, %arg4: memref<1x1x128xf32, #tpu.memory_space<vmem>>) attributes {dimension_semantics = [#tpu.dimension_semantics<parallel>], iteration_bounds = array<i64: 2>, scalar_prefetch = 0 : i64, scratch_operands = 0 : i64, tpu.core_type = #tpu.core_type<tc>, window_params = [{transform_indices = @transform_0, window_bounds = array<i64: 8, 128>}, {pipeline_mode = #tpu.pipeline_mode<synchronous>, transform_indices = @transform_1, window_bounds = array<i64: 128, 128>}, {pipeline_mode = #tpu.pipeline_mode<synchronous>, transform_indices = @transform_2, window_bounds = array<i64: 1, 128>}, {transform_indices = @transform_3, window_bounds = array<i64: 1, 1, 128>}]} {
    %c0 = arith.constant 0 : index
    %c0_0 = arith.constant 0 : index
    %0 = vector.load %arg1[%c0, %c0_0] : memref<8x128xf32, #tpu.memory_space<vmem>>, vector<8x128xf32>
    %c0_1 = arith.constant 0 : index
    %c0_2 = arith.constant 0 : index
    %1 = vector.load %arg2[%c0_1, %c0_2] : memref<128x128xf32, #tpu.memory_space<vmem>>, vector<128x128xf32>
    %cst = arith.constant dense<0.000000e+00> : vector<8x128xf32>
    %2 = tpu.matmul %0, %1, %cst {dimension_numbers = #tpu.dot_dimension_numbers<[1], [0], [0], [1], [0, 0, 1, 1], [], []>} : vector<8x128xf32>, vector<128x128xf32>, vector<8x128xf32> -> vector<8x128xf32>
    %c0_3 = arith.constant 0 : index
    %c0_4 = arith.constant 0 : index
    %3 = vector.load %arg3[%c0_3, %c0_4] : memref<1x128xf32, #tpu.memory_space<vmem>>, vector<1x128xf32>
    %4 = vector.broadcast %3 : vector<1x128xf32> to vector<8x128xf32>
    %5 = arith.subf %2, %4 : vector<8x128xf32>
    %6 = tpu.iota {dimensions = array<i32: 0>} : vector<8x128xi32>
    %c8_i32 = arith.constant 8 : i32
    %7 = arith.muli %arg0, %c8_i32 : i32
    %8 = vector.broadcast %7 : i32 to vector<8x128xi32>
    %9 = arith.addi %6, %8 : vector<8x128xi32>
    %c12_i32 = arith.constant 12 : i32
    %10 = vector.broadcast %c12_i32 : i32 to vector<8x128xi32>
    %11 = arith.cmpi slt, %9, %10 : vector<8x128xi32>
    %cst_5 = arith.constant 0.000000e+00 : f32
    %12 = vector.broadcast %cst_5 : f32 to vector<8x128xf32>
    %13 = arith.select %11, %5, %12 : vector<8x128xi1>, vector<8x128xf32>
    %14 = arith.mulf %13, %13 : vector<8x128xf32>
    %cst_6 = arith.constant dense<0.000000e+00> : vector<128xf32>
    %15 = vector.multi_reduction <add>, %14, %cst_6 [0] : vector<8x128xf32> to vector<128xf32>
    %16 = vector.shape_cast %15 : vector<128xf32> to vector<1x128xf32>
    %17 = vector.shape_cast %16 : vector<1x128xf32> to vector<1x1x128xf32>
    %c0_7 = arith.constant 0 : index
    %c0_8 = arith.constant 0 : index
    %c0_9 = arith.constant 0 : index
    %18 = vector.load %arg4[%c0_7, %c0_8, %c0_9] : memref<1x1x128xf32, #tpu.memory_space<vmem>>, vector<1x1x128xf32>
    tpu.vector_store %arg4[%c0_7, %c0_8, %c0_9], %17 {strides = array<i32>} : memref<1x1x128xf32, #tpu.memory_space<vmem>>, vector<1x1x128xf32>,
    return
  }
  func.func @transform_0(%arg0: i32) -> (i32, i32) {
    %c0_i32 = arith.constant 0 : i32
    %c0_i32_0 = arith.constant 0 : i32
    return %arg0, %c0_i32 : i32, i32
  }
  func.func @transform_1(%arg0: i32) -> (i32, i32) {
    %c0_i32 = arith.constant 0 : i32
    %c0_i32_0 = arith.constant 0 : i32
    %c0_i32_1 = arith.constant 0 : i32
    return %c0_i32, %c0_i32_0 : i32, i32
  }
  func.func @transform_2(%arg0: i32) -> (i32, i32) {
    %c0_i32 = arith.constant 0 : i32
    %c0_i32_0 = arith.constant 0 : i32
    %c0_i32_1 = arith.constant 0 : i32
    return %c0_i32, %c0_i32_0 : i32, i32
  }
  func.func @transform_3(%arg0: i32) -> (i32, i32, i32) {
    %c0_i32 = arith.constant 0 : i32
    %c0_i32_0 = arith.constant 0 : i32
    %c0_i32_1 = arith.constant 0 : i32
    return %arg0, %c0_i32, %c0_i32_0 : i32, i32, i32
  }
}

</mosaic_0001>

<llo_original>
// kernel: tpu_custom_call.1
$region0: #{tpu_custom_call.1}
  #allocation0 [shape = 'u32[]', space=smem, size = 0x4, offset = 0x4, fixed_abs, tag = 'smem constant byte address 0x4 - core index']
  #allocation1 [shape = 'u32[72,128]{1,0:T(1,128)}', space=vmem, size = 0x9000, scoped, tag = 'internal scratch']
  %s0 = inlined_call_operand.hbm [shape: f32[16,128], index: 0, kind: input, shape index: {}]
  %s1 = inlined_call_operand.hbm [shape: f32[128,128], index: 1, kind: input, shape index: {}]
  %s2 = inlined_call_operand.vmem [shape: f32[1,128], index: 2, kind: input, shape index: {}]
  %s3 = inlined_call_operand.hbm [shape: f32[2,1,128], index: 3, kind: output, shape index: {}]
  %s4 = sld [smem:[#allocation0]]
  $region53: #{tpu_custom_call.1} parent=0
    _
  %s6 = ssub.s32 1, %s4
  %s7 = scalar_select 0, %s6, %s4
  $region1: #{tpu_custom_call.1} parent=0
    #allocation2 [shape = 'u8[8192]{0}', space=vmem, size = 0x2000, scoped, tag = 'input window, operand 0']
    #allocation3 [shape = 's32[2]{0}', space=sflag, size = 0x8, scoped, tag = 'scoped memory for tpu_custom_call.1']
    #allocation4 [shape = 's32[2]{0}', space=sflag, size = 0x8, scoped, tag = 'scoped memory for tpu_custom_call.1']
    #allocation5 [shape = 'u8[65536]{0}', space=vmem, size = 0x10000, scoped, tag = 'input window, operand 1, single buffered']
    #allocation6 [shape = 's32[1]{0}', space=sflag, size = 0x4, scoped, tag = 'scoped memory for tpu_custom_call.1']
    #allocation7 [shape = 'u8[1024]{0}', space=vmem, size = 0x400, scoped, tag = 'output window, operand 0']
    %8 = vsyncpa [#allocation3], 0
    %s9 = scalar_lea.sflag [#allocation3], 1
    %10 = vsyncpa %s9, 0
    %11 = vsyncpa [#allocation6], 0
    %12 = vsyncpa [#allocation4], 0
    %s13 = scalar_lea.sflag [#allocation4], 1
    %14 = vsyncpa %s13, 0
    loop: start=0, step=1, limit=4
    $region2: #{tpu_custom_call.1} parent=1 // loop_pre_header
      _
    $region3: #{tpu_custom_call.1} parent=1 // loop_header
      %s16 = sphi 0, %s20
      %p17 = scmp.ge.s32.totalorder %s16, 4
      %s26 = sphi 0, %s28
      %s29 = sphi 0, %s26
      %s30 = sphi 0, %s29
      %s46 = sphi 0, %s30
      %s50 = sphi 0, %s50
      %s52 = sphi 0, %s50
      %s53 = sphi 0, %s52
      %s67 = sphi 0, %s53
      %s71 = sphi 0, %s71
      %s73 = sphi 0, %s71
      %s74 = sphi 0, %s73
      %s88 = sphi 0, %s74
      %s94 = sphi 0, %s96
      %s97 = sphi 0, %s94
      %s98 = sphi 0, %s97
      %s114 = sphi 0, %s98
    $region4: #{tpu_custom_call.1} parent=1 // loop_header_branch
      %19 = sbr.rel (%p17) target = $region8
    $region5: #{tpu_custom_call.1} parent=1 // loop_body
      %s21 = ssub.s32 %s16, 1
      %s22 = ssub.s32 %s16, 2
      %s23 = sadd.s32 %s16, 1
      %s24 = ssub.s32 %s16, %s23
      %p25 = scmp.eq.s32.totalorder %s24, 0
      %s27 = sadd.s32 %s26, 1
      %s28 = scalar_select %p25, %s26, %s27
      %p31 = pneg %p25
      %p32 = scmp.eq.s32.totalorder %s16, 1
      %p33 = por %p31, %p32
      %p34 = scmp.ne.s32.totalorder %s26, %s29
      %p35 = scmp.eq.s32.totalorder %s16, 0
      %p36 = por %p34, %p35
      %p37 = scmp.ne.s32.totalorder %s26, %s29
      %p38 = scmp.eq.s32.totalorder %s21, 1
      %p39 = por %p37, %p38
      %p40 = scmp.ne.s32.totalorder %s29, %s30
      %p41 = scmp.eq.s32.totalorder %s21, 0
      %p42 = por %p40, %p41
      %p43 = scmp.ne.s32.totalorder %s29, %s30
      %p44 = scmp.eq.s32.totalorder %s22, 1
      %p45 = por %p43, %p44
      %p47 = scmp.ne.s32.totalorder %s30, %s46
      %p48 = scmp.eq.s32.totalorder %s22, 0
      %p49 = por %p47, %p48
      %s51 = sadd.s32 %s50, 1
      %p54 = scmp.eq.s32.totalorder %s16, 1
      %p55 = scmp.ne.s32.totalorder %s50, %s52
      %p56 = scmp.eq.s32.totalorder %s16, 0
      %p57 = por %p55, %p56
      %p58 = scmp.ne.s32.totalorder %s50, %s52
      %p59 = scmp.eq.s32.totalorder %s21, 1
      %p60 = por %p58, %p59
      %p61 = scmp.ne.s32.totalorder %s52, %s53
      %p62 = scmp.eq.s32.totalorder %s21, 0
      %p63 = por %p61, %p62
      %p64 = scmp.ne.s32.totalorder %s52, %s53
      %p65 = scmp.eq.s32.totalorder %s22, 1
      %p66 = por %p64, %p65
      %p68 = scmp.ne.s32.totalorder %s53, %s67
      %p69 = scmp.eq.s32.totalorder %s22, 0
      %p70 = por %p68, %p69
      %s72 = sadd.s32 %s71, 1
      %p75 = scmp.eq.s32.totalorder %s16, 1
      %p76 = scmp.ne.s32.totalorder %s71, %s73
      %p77 = scmp.eq.s32.totalorder %s16, 0
      %p78 = por %p76, %p77
      %p79 = scmp.ne.s32.totalorder %s71, %s73
      %p80 = scmp.eq.s32.totalorder %s21, 1
      %p81 = por %p79, %p80
      %p82 = scmp.ne.s32.totalorder %s73, %s74
      %p83 = scmp.eq.s32.totalorder %s21, 0
      %p84 = por %p82, %p83
      %p85 = scmp.ne.s32.totalorder %s73, %s74
      %p86 = scmp.eq.s32.totalorder %s22, 1
      %p87 = por %p85, %p86
      %p89 = scmp.ne.s32.totalorder %s74, %s88
      %p90 = scmp.eq.s32.totalorder %s22, 0
      %p91 = por %p89, %p90
      %s92 = ssub.s32 %s16, %s23
      %p93 = scmp.eq.s32.totalorder %s92, 0
      %s95 = sadd.s32 %s94, 1
      %s96 = scalar_select %p93, %s94, %s95
      %p99 = pneg %p93
      %p100 = scmp.eq.s32.totalorder %s16, 1
      %p101 = por %p99, %p100
      %p102 = scmp.ne.s32.totalorder %s94, %s97
      %p103 = scmp.eq.s32.totalorder %s16, 0
      %p104 = por %p102, %p103
      %p105 = scmp.ne.s32.totalorder %s94, %s97
      %p106 = scmp.eq.s32.totalorder %s21, 1
      %p107 = por %p105, %p106
      %p108 = scmp.ne.s32.totalorder %s97, %s98
      %p109 = scmp.eq.s32.totalorder %s21, 0
      %p110 = por %p108, %p109
      %p111 = scmp.ne.s32.totalorder %s97, %s98
      %p112 = scmp.eq.s32.totalorder %s22, 1
      %p113 = por %p111, %p112
      %p115 = scmp.ne.s32.totalorder %s98, %s114
      %p116 = scmp.eq.s32.totalorder %s22, 0
      %p117 = por %p115, %p116
      %p118 = scmp.le.s32.totalorder 1, %s16
      %p119 = scmp.lt.s32.totalorder %s16, 3
      %p120 = pnand %p118, %p119
      %p121 = pneg %p120
      // Predicated region
      $region9: #{tpu_custom_call.1} parent=5 // pred_check
        _
      $region10: #{tpu_custom_call.1} parent=5 // pred_check_branch
        %123 = sbr.rel (%p120) target = $region12
      $region11: #{tpu_custom_call.1} parent=5 // pred_region
        %s124 = ssub.s32 %s16, 1
        // Predicated region
        $region13: #{tpu_custom_call.1} parent=11 // pred_check
          %p125 = pneg %p63
        $region14: #{tpu_custom_call.1} parent=11 // pred_check_branch
          %127 = sbr.rel (%p125) target = $region16
        $region15: #{tpu_custom_call.1} parent=11 // pred_region
          %129 = vsyncadd [#allocation6], 0
          %s130 = sshll.u32 %s1, 4
          %s131 = int_to_ptr.hbm [resolvable:$true] %s130
          %s132 = sshll.u32 [#allocation5], 4
          %s133 = int_to_ptr.vmem [resolvable:$true] %s132
          %138 = dma.hbm_to_vmem [thread:$0]  %s131, 2048, %s133, [#allocation6], 128, 128, 8
        $region16: #{tpu_custom_call.1} parent=11 // pred_fallthru
          _
        // Predicated region
        $region17: #{tpu_custom_call.1} parent=11 // pred_check
          %p139 = pneg %p84
        $region18: #{tpu_custom_call.1} parent=11 // pred_check_branch
          %141 = sbr.rel (%p139) target = $region20
        $region19: #{tpu_custom_call.1} parent=11 // pred_region
          _
        $region20: #{tpu_custom_call.1} parent=11 // pred_fallthru
          _
      $region12: #{tpu_custom_call.1} parent=5 // pred_fallthru
        _
      %p142 = scmp.lt.s32.totalorder %s16, 2
      // Predicated region
      $region21: #{tpu_custom_call.1} parent=5 // pred_check
        %p143 = pneg %p142
      $region22: #{tpu_custom_call.1} parent=5 // pred_check_branch
        %145 = sbr.rel (%p143) target = $region24
      $region23: #{tpu_custom_call.1} parent=5 // pred_region
        // Predicated region
        $region25: #{tpu_custom_call.1} parent=23 // pred_check
          %p146 = pneg %p36
        $region26: #{tpu_custom_call.1} parent=23 // pred_check_branch
          %148 = sbr.rel (%p146) target = $region28
        $region27: #{tpu_custom_call.1} parent=23 // pred_region
          %s149 = sand.u32 %s26, 1
          %s150 = scalar_lea.sflag [#allocation3], %s149
          %s151 = sand.u32 %s26, 1
          %s152 = smul.addr %s151, 8
          %s153 = scalar_lea.vmem [#allocation2], %s152
          %155 = vsyncadd %s150, 0
          %s156 = smul.addr %s16, 8
          %s157 = scalar_lea.hbm %s0, %s156
          %s159 = sshll.u32 %s157, 4
          %s160 = int_to_ptr.hbm [resolvable:$true] %s159
          %s161 = sshll.u32 %s153, 4
          %s162 = int_to_ptr.vmem [resolvable:$true] %s161
          %164 = dma.hbm_to_vmem [thread:$0]  %s160, 128, %s162, %s150
        $region28: #{tpu_custom_call.1} parent=23 // pred_fallthru
          _
      $region24: #{tpu_custom_call.1} parent=5 // pred_fallthru
        _
      %p165 = scmp.le.s32.totalorder 1, %s16
      %p166 = scmp.lt.s32.totalorder %s16, 3
      %p167 = pnand %p165, %p166
      %p168 = pneg %p167
      // Predicated region
      $region29: #{tpu_custom_call.1} parent=5 // pred_check
        _
      $region30: #{tpu_custom_call.1} parent=5 // pred_check_branch
        %170 = sbr.rel (%p167) target = $region32
      $region31: #{tpu_custom_call.1} parent=5 // pred_region
        %s171 = ssub.s32 %s16, 1
        %s172 = sand.u32 %s29, 1
        %s173 = scalar_lea.sflag [#allocation3], %s172
        %s174 = sand.u32 %s29, 1
        %s175 = smul.addr %s174, 8
        %s176 = scalar_lea.vmem [#allocation2], %s175
        // Predicated region
        $region33: #{tpu_custom_call.1} parent=31 // pred_check
          %p177 = pneg %p42
        $region34: #{tpu_custom_call.1} parent=31 // pred_check_branch
          %179 = sbr.rel (%p177) target = $region36
        $region35: #{tpu_custom_call.1} parent=31 // pred_region
          %181 = dma.done %s173, 128
        $region36: #{tpu_custom_call.1} parent=31 // pred_fallthru
          _
        // Predicated region
        $region37: #{tpu_custom_call.1} parent=31 // pred_check
          %p182 = pneg %p63
        $region38: #{tpu_custom_call.1} parent=31 // pred_check_branch
          %184 = sbr.rel (%p182) target = $region40
        $region39: #{tpu_custom_call.1} parent=31 // pred_region
          %186 = dma.done [#allocation6], 2048
        $region40: #{tpu_custom_call.1} parent=31 // pred_fallthru
          _
        %s187 = sand.u32 %s29, 1
        %s188 = scalar_lea.sflag [#allocation3], %s187
        %s189 = sand.u32 %s29, 1
        %s190 = smul.addr %s189, 8
        %s191 = scalar_lea.vmem [#allocation2], %s190
        %p192 = pneg %p42
        %p193 = pneg %p39
        %p194 = pneg %p63
        %p195 = pneg %p60
        %p196 = pneg %p84
        %p197 = pneg %p81
        %p198 = pneg %p110
        %p199 = pneg %p107
        %s200 = sand.u32 %s97, 1
        %s201 = scalar_lea.sflag [#allocation4], %s200
        %s202 = sand.u32 %s97, 1
        %s203 = scalar_lea.vmem [#allocation7], %s202
        %v204 = vld [vmem:[%s176] sm:$0xff]
        %v205 = vld [vmem:[#allocation5] sm:$0xff]
        %v206 = vld [vmem:[#allocation5 + $0x8] sm:$0xff]
        %v207 = vld [vmem:[#allocation5 + $0x10] sm:$0xff]
        %v208 = vld [vmem:[#allocation5 + $0x18] sm:$0xff]
        %v209 = vld [vmem:[#allocation5 + $0x20] sm:$0xff]
        %v210 = vld [vmem:[#allocation5 + $0x28] sm:$0xff]
        %v211 = vld [vmem:[#allocation5 + $0x30] sm:$0xff]
        %v212 = vld [vmem:[#allocation5 + $0x38] sm:$0xff]
        %v213 = vld [vmem:[#allocation5 + $0x40] sm:$0xff]
        %v214 = vld [vmem:[#allocation5 + $0x48] sm:$0xff]
        %v215 = vld [vmem:[#allocation5 + $0x50] sm:$0xff]
        %v216 = vld [vmem:[#allocation5 + $0x58] sm:$0xff]
        %v217 = vld [vmem:[#allocation5 + $0x60] sm:$0xff]
        %v218 = vld [vmem:[#allocation5 + $0x68] sm:$0xff]
        %v219 = vld [vmem:[#allocation5 + $0x70] sm:$0xff]
        %v220 = vld [vmem:[#allocation5 + $0x78] sm:$0xff]
        %221 = vmatpush.msra.mxu0 %v220
        %222 = vmatpush.msra.mxu0 %v219
        %223 = vmatpush.msra.mxu0 %v218
        %224 = vmatpush.msra.mxu0 %v217
        %225 = vmatpush.msra.mxu0 %v216
        %226 = vmatpush.msra.mxu0 %v215
        %227 = vmatpush.msra.mxu0 %v214
        %228 = vmatpush.msra.mxu0 %v213
        %229 = vmatpush.msra.mxu0 %v212
        %230 = vmatpush.msra.mxu0 %v211
        %231 = vmatpush.msra.mxu0 %v210
        %232 = vmatpush.msra.mxu0 %v209
        %233 = vmatpush.msra.mxu0 %v208
        %234 = vmatpush.msra.mxu0 %v207
        %235 = vmatpush.msra.mxu0 %v206
        %236 = vmatpush.msra.mxu0 %v205
        %237 = vmatmul.f32.gmra.mxu0 %v204
        %v238 = vpop.f32.mrf.mxu0
        %v239 = vadd.f32 0.0, %v238
        %240 = vdwg.mxu0
        %v241 = vld [vmem:[%s2] sm:$0x1]
        %v243 = vperm.slane %v241, 0
        %v245 = vsub.f32 %v239, %v243
        %v246 = vlaneseq
        %v247 = vshrl.u32 %v246, 7
        %s248 = smul.u32 %s21, 8
        %v249 = vstv %s248
        %v250 = vadd.s32 %v247, %v249
        %vm251 = vcmp.lt.s32.totalorder %v250, 12
        %v252 = vsel %vm251, %v245, 0.0
        %v253 = vmul.f32 %v252, %v252
        %v254 = vrot.slane %v253, 4
        %v255 = vadd.f32 %v253, %v254
        %v256 = vrot.slane %v255, 2
        %v257 = vadd.f32 %v255, %v256
        %v258 = vrot.slane %v257, 1
        %v259 = vadd.f32 %v257, %v258
        %260 = vst [vmem:[%s203] sm:$0x1] %v259
        %s261 = sand.u32 %s97, 1
        %s262 = scalar_lea.sflag [#allocation4], %s261
        %s263 = sand.u32 %s97, 1
        %s264 = scalar_lea.vmem [#allocation7], %s263
        // Predicated region
        $region41: #{tpu_custom_call.1} parent=31 // pred_check
          %p265 = pneg %p107
        $region42: #{tpu_custom_call.1} parent=31 // pred_check_branch
          %267 = sbr.rel (%p265) target = $region44
        $region43: #{tpu_custom_call.1} parent=31 // pred_region
          %269 = vsyncadd %s262, 0
          %s270 = scalar_lea.hbm %s3, %s21
          %s272 = sshll.u32 %s264, 4
          %s273 = int_to_ptr.vmem [resolvable:$true] %s272
          %s274 = sshll.u32 %s270, 4
          %s275 = int_to_ptr.hbm [resolvable:$true] %s274
          %277 = dma.vmem_to_hbm [thread:$0]  %s273, 16, %s275, %s262
        $region44: #{tpu_custom_call.1} parent=31 // pred_fallthru
          _
      $region32: #{tpu_custom_call.1} parent=5 // pred_fallthru
        _
      %p278 = scmp.le.s32.totalorder 2, %s16
      // Predicated region
      $region45: #{tpu_custom_call.1} parent=5 // pred_check
        %p279 = pneg %p278
      $region46: #{tpu_custom_call.1} parent=5 // pred_check_branch
        %281 = sbr.rel (%p279) target = $region48
      $region47: #{tpu_custom_call.1} parent=5 // pred_region
        %s282 = ssub.s32 %s16, 2
        // Predicated region
        $region49: #{tpu_custom_call.1} parent=47 // pred_check
          %p283 = pneg %p113
        $region50: #{tpu_custom_call.1} parent=47 // pred_check_branch
          %285 = sbr.rel (%p283) target = $region52
        $region51: #{tpu_custom_call.1} parent=47 // pred_region
          %s286 = sand.u32 %s98, 1
          %s287 = scalar_lea.sflag [#allocation4], %s286
          %s288 = sand.u32 %s98, 1
          %s289 = scalar_lea.vmem [#allocation7], %s288
          %291 = dma.done %s287, 16
        $region52: #{tpu_custom_call.1} parent=47 // pred_fallthru
          _
      $region48: #{tpu_custom_call.1} parent=5 // pred_fallthru
        _
    $region6: #{tpu_custom_call.1} parent=1 // loop_footer
      %s20 = sadd.s32 1, %s16
    $region7: #{tpu_custom_call.1} parent=1 // loop_footer_branch
      %15 = sbr.rel target = $region3
    $region8: #{tpu_custom_call.1} parent=1 // loop_exit
      _
    %292 = vsyncpa [#allocation3], 1
    %s293 = scalar_lea.sflag [#allocation3], 1
    %294 = vsyncpa %s293, 1
    %295 = vsyncpa [#allocation6], 1
    %296 = vsyncpa [#allocation4], 1
    %s297 = scalar_lea.sflag [#allocation4], 1
    %298 = vsyncpa %s297, 1

</llo_original>
